<compile_context>
chip_gen: v5e
topology: v5e:2x2
jax: 0.10.0
libtpu: 0.0.40
codegen_flags: <defaults>
</compile_context>

<pallas_src>
import jax
import jax.numpy as jnp
from jax.experimental import pallas as pl
from jax.experimental.pallas import tpu as pltpu


def _make_kernel(ksize: int, tl: int, tiled: bool):
    def kernel(x_ref, halo_ref, w_ref, b_ref, o_ref):
        # x_ref:    (1, C_in, TL)       (tiled)  or (1, C_in, L) (fallback)
        # halo_ref: (1, 1, C_in, K-1)   (ignored in fallback / K == 1)
        # w_ref:    (K, C_out, C_in)    resident (constant index_map)
        # b_ref:    (C_out, 1) f32      resident
        # o_ref:    (1, C_out, TL)      lane-dense output tile
        c_out = o_ref.shape[1]

        if tiled and ksize > 1:
            # (C_in, TL + K - 1) window: this tile's columns + K-1 halo cols.
            window = jnp.concatenate([x_ref[0], halo_ref[0, 0]], axis=1)
        else:
            window = x_ref[0]

        # Bias folded into the f32 accumulator init (hoisted out of the loop).
        acc = jnp.broadcast_to(b_ref[...].astype(jnp.float32), (c_out, tl))

        # Conv1d as K shifted matmuls; all slice starts are static.
        # (At these tiny channel counts the MXU is underfed but the kernel is
        #  HBM-bound, so this is not on the critical path.)
        for k in range(ksize):
            acc = acc + jnp.dot(w_ref[k], window[:, k:k + tl],
                                preferred_element_type=jnp.float32)

        # Numerically stable logsigmoid, kept in f32 (v5e has no bf16 VPU).
        y = jnp.minimum(acc, 0.0) - jnp.log1p(jnp.exp(-jnp.abs(acc)))
        o_ref[0] = y.astype(o_ref.dtype)

    return kernel


def conv_logsigmoid(x_ncl, weight, bias, *, compute_dtype=None,
                    max_lane_tile=512):
    """Conv1d (valid, stride 1) + LogSigmoid.

    x_ncl: (N, C_in, L); weight: (C_out, C_in, K); bias: (C_out,).
    Returns (N, C_out, L_out) in x_ncl.dtype, L_out = L - K + 1.
    """
    n, c_in, l = x_ncl.shape
    c_out, _, ksize = weight.shape
    l_out = l - ksize + 1
    assert l_out >= 1, "kernel_size larger than sequence length"
    out_dtype = x_ncl.dtype

    # Only the (tiny) weight tensor is reordered host-side; x / output are not.
    w_koc = jnp.transpose(weight, (2, 0, 1))            # (K, C_out, C_in)
    b_col = bias.astype(jnp.float32).reshape(c_out, 1)

    if compute_dtype is not None:
        x_in = x_ncl.astype(compute_dtype)
        w_in = w_koc.astype(compute_dtype)
    else:
        x_in, w_in = x_ncl, w_koc

    # Lane tile for L_out: largest of {max_lane_tile, 256, 128} dividing L_out
    # (keeps the block a multiple of 128); otherwise fall back to the full
    # (untiled) extent, which is always a legal full-dim block.
    tl, tiled = l_out, False
    if l_out % 128 == 0:
        for cand in (max_lane_tile, 256, 128):
            if cand % 128 == 0 and l_out % cand == 0:
                tl, tiled = cand, True
                break
    num_tiles = l_out // tl
    halo_w = max(ksize - 1, 1)

    if tiled and ksize > 1:
        # halo[n, j] = x[n, :, (j+1)*TL : (j+1)*TL + K - 1]  (tiny side array)
        starts = (jnp.arange(num_tiles, dtype=jnp.int32) + 1) * tl
        idx = starts[:, None] + jnp.arange(ksize - 1, dtype=jnp.int32)[None, :]
        halo = jnp.take(x_in, idx, axis=2)               # (N, C_in, T, K-1)
        halo = jnp.transpose(halo, (0, 2, 1, 3))         # (N, T, C_in, K-1)
    else:
        halo = jnp.zeros((n, num_tiles, c_in, halo_w), x_in.dtype)

    x_block_l = tl if tiled else l
    x_index_map = (lambda i, j: (i, 0, j)) if tiled else (lambda i, j: (i, 0, 0))
    in_specs = [
        pl.BlockSpec((1, c_in, x_block_l), x_index_map),
        pl.BlockSpec((1, 1, c_in, halo_w), lambda i, j: (i, j, 0, 0)),
        pl.BlockSpec((ksize, c_out, c_in), lambda i, j: (0, 0, 0)),
        pl.BlockSpec((c_out, 1), lambda i, j: (0, 0)),
    ]
    out_spec = pl.BlockSpec((1, c_out, tl), lambda i, j: (i, 0, j))

    # Explicit VMEM budget: double-buffered x/out/halo blocks + resident
    # weights/bias + f32 accumulator, generous headroom, clamped to a range
    # that is safe on every generation (v7x has only 64 MiB physical).
    isz = jnp.dtype(x_in.dtype).itemsize
    osz = jnp.dtype(out_dtype).itemsize
    est = (2 * (c_in * x_block_l * isz + c_out * tl * osz + c_in * halo_w * isz)
           + ksize * c_out * c_in * isz + c_out * 4 + 4 * c_out * tl)
    vmem_limit = int(min(max(8 * est, 16 * 2 ** 20), 32 * 2 ** 20))

    return pl.pallas_call(
        _make_kernel(ksize, tl, tiled),
        out_shape=jax.ShapeDtypeStruct((n, c_out, l_out), out_dtype),
        grid_spec=pltpu.PrefetchScalarGridSpec(
            num_scalar_prefetch=0,
            grid=(n, num_tiles),
            in_specs=in_specs,
            out_specs=out_spec,
        ),
        compiler_params=pltpu.CompilerParams(
            dimension_semantics=("parallel", "parallel"),
            vmem_limit_bytes=vmem_limit),
    )(x_in, halo, w_in, b_col)


def _reference(x_ncl, weight, bias):
    """Pure-JAX reference: Conv1d (NCL) + logsigmoid."""
    out = jax.lax.conv_general_dilated(
        x_ncl, weight, window_strides=(1,), padding="VALID",
        dimension_numbers=("NCH", "OIH", "NCH"))
    out = out + bias[None, :, None]
    return jnp.minimum(out, 0.0) - jnp.log1p(jnp.exp(-jnp.abs(out)))


if __name__ == "__main__":
    def make_inputs(key, n, c_in, c_out, ksize, l):
        kx, kw, kb = jax.random.split(key, 3)
        x = jax.random.normal(kx, (n, c_in, l), dtype=jnp.float32)
        fan_in = c_in * ksize
        bound = 1.0 / (fan_in ** 0.5)
        w = jax.random.uniform(kw, (c_out, c_in, ksize), jnp.float32, -bound, bound)
        b = jax.random.uniform(kb, (c_out,), jnp.float32, -bound, bound)
        return x, w, b

    # 1) Small shape (untiled fallback path), f32.
    x, w, b = make_inputs(jax.random.PRNGKey(0), 2, 4, 8, 3, 16)
    out = jax.block_until_ready(conv_logsigmoid(x, w, b))
    ref = jax.block_until_ready(_reference(x, w, b))
    assert out.shape == (2, 8, 14), out.shape
    assert jnp.allclose(out, ref, atol=1e-5, rtol=1e-5), "f32 small mismatch"

    # 2) Lane-tiled path (L_out = 1024 -> two 512-wide lane tiles + halo), f32.
    x2, w2, b2 = make_inputs(jax.random.PRNGKey(1), 2, 4, 8, 3, 1026)
    out2 = jax.block_until_ready(conv_logsigmoid(x2, w2, b2))
    ref2 = jax.block_until_ready(_reference(x2, w2, b2))
    assert out2.shape == (2, 8, 1024), out2.shape
    assert jnp.allclose(out2, ref2, atol=1e-5, rtol=1e-5), "f32 tiled mismatch"

    # 3) bf16 inputs/weights (f32 accumulate + f32 epilogue), loose tolerance.
    out3 = jax.block_until_ready(
        conv_logsigmoid(x2, w2, b2, compute_dtype=jnp.bfloat16))
    assert jnp.allclose(out3, ref2, atol=3e-2, rtol=3e-2), "bf16 mismatch"

    print("KERNEL_OK")
</pallas_src>

<mosaic_0001>
module attributes {stable_mosaic.version = 11 : i64} {
  func.func @kernel(%arg0: i32, %arg1: i32, %arg2: memref<1x4x16xf32, #tpu.memory_space<vmem>>, %arg3: memref<1x1x4x2xf32, #tpu.memory_space<vmem>>, %arg4: memref<3x8x4xf32, #tpu.memory_space<vmem>>, %arg5: memref<8x1xf32, #tpu.memory_space<vmem>>, %arg6: memref<1x8x14xf32, #tpu.memory_space<vmem>>) attributes {dimension_semantics = [#tpu.dimension_semantics<parallel>, #tpu.dimension_semantics<parallel>], iteration_bounds = array<i64: 2, 1>, scalar_prefetch = 0 : i64, scratch_operands = 0 : i64, tpu.core_type = #tpu.core_type<tc>, window_params = [{transform_indices = @transform_0, window_bounds = array<i64: 1, 4, 16>}, {transform_indices = @transform_1, window_bounds = array<i64: 1, 1, 4, 2>}, {pipeline_mode = #tpu.pipeline_mode<synchronous>, transform_indices = @transform_2, window_bounds = array<i64: 3, 8, 4>}, {pipeline_mode = #tpu.pipeline_mode<synchronous>, transform_indices = @transform_3, window_bounds = array<i64: 8, 1>}, {transform_indices = @transform_4, window_bounds = array<i64: 1, 8, 14>}]} {
    %c0 = arith.constant 0 : index
    %c0_0 = arith.constant 0 : index
    %c0_1 = arith.constant 0 : index
    %0 = vector.load %arg2[%c0, %c0_0, %c0_1] : memref<1x4x16xf32, #tpu.memory_space<vmem>>, vector<1x4x16xf32>
    %1 = vector.shape_cast %0 : vector<1x4x16xf32> to vector<4x16xf32>
    %c0_2 = arith.constant 0 : index
    %c0_3 = arith.constant 0 : index
    %2 = vector.load %arg5[%c0_2, %c0_3] : memref<8x1xf32, #tpu.memory_space<vmem>>, vector<8x1xf32>
    %3 = vector.shape_cast %2 : vector<8x1xf32> to vector<8x1xf32>
    %4 = vector.broadcast %3 : vector<8x1xf32> to vector<8x14xf32>
    %c0_4 = arith.constant 0 : index
    %c0_5 = arith.constant 0 : index
    %c0_6 = arith.constant 0 : index
    %5 = vector.load %arg4[%c0_4, %c0_5, %c0_6] : memref<3x8x4xf32, #tpu.memory_space<vmem>>, vector<1x8x4xf32>
    %6 = vector.shape_cast %5 : vector<1x8x4xf32> to vector<8x4xf32>
    %7 = vector.extract_strided_slice %1 {offsets = [0, 0], sizes = [4, 14], strides = [1, 1]} : vector<4x16xf32> to vector<4x14xf32>
    %cst = arith.constant dense<0.000000e+00> : vector<8x14xf32>
    %8 = tpu.matmul %6, %7, %cst {dimension_numbers = #tpu.dot_dimension_numbers<[1], [0], [0], [1], [0, 0, 1, 1], [], []>} : vector<8x4xf32>, vector<4x14xf32>, vector<8x14xf32> -> vector<8x14xf32>
    %9 = arith.addf %4, %8 : vector<8x14xf32>
    %c1 = arith.constant 1 : index
    %c0_7 = arith.constant 0 : index
    %c0_8 = arith.constant 0 : index
    %10 = vector.load %arg4[%c1, %c0_7, %c0_8] : memref<3x8x4xf32, #tpu.memory_space<vmem>>, vector<1x8x4xf32>
    %11 = vector.shape_cast %10 : vector<1x8x4xf32> to vector<8x4xf32>
    %12 = vector.extract_strided_slice %1 {offsets = [0, 1], sizes = [4, 14], strides = [1, 1]} : vector<4x16xf32> to vector<4x14xf32>
    %cst_9 = arith.constant dense<0.000000e+00> : vector<8x14xf32>
    %13 = tpu.matmul %11, %12, %cst_9 {dimension_numbers = #tpu.dot_dimension_numbers<[1], [0], [0], [1], [0, 0, 1, 1], [], []>} : vector<8x4xf32>, vector<4x14xf32>, vector<8x14xf32> -> vector<8x14xf32>
    %14 = arith.addf %9, %13 : vector<8x14xf32>
    %c2 = arith.constant 2 : index
    %c0_10 = arith.constant 0 : index
    %c0_11 = arith.constant 0 : index
    %15 = vector.load %arg4[%c2, %c0_10, %c0_11] : memref<3x8x4xf32, #tpu.memory_space<vmem>>, vector<1x8x4xf32>
    %16 = vector.shape_cast %15 : vector<1x8x4xf32> to vector<8x4xf32>
    %17 = vector.extract_strided_slice %1 {offsets = [0, 2], sizes = [4, 14], strides = [1, 1]} : vector<4x16xf32> to vector<4x14xf32>
    %cst_12 = arith.constant dense<0.000000e+00> : vector<8x14xf32>
    %18 = tpu.matmul %16, %17, %cst_12 {dimension_numbers = #tpu.dot_dimension_numbers<[1], [0], [0], [1], [0, 0, 1, 1], [], []>} : vector<8x4xf32>, vector<4x14xf32>, vector<8x14xf32> -> vector<8x14xf32>
    %19 = arith.addf %14, %18 : vector<8x14xf32>
    %cst_13 = arith.constant 0.000000e+00 : f32
    %20 = vector.broadcast %cst_13 : f32 to vector<8x14xf32>
    %21 = arith.minimumf %19, %20 : vector<8x14xf32>
    %22 = math.absf %19 : vector<8x14xf32>
    %cst_14 = arith.constant 0.000000e+00 : f32
    %23 = vector.broadcast %cst_14 : f32 to vector<8x14xf32>
    %24 = arith.subf %23, %22 : vector<8x14xf32>
    %25 = math.exp %24 : vector<8x14xf32>
    %26 = math.log1p %25 : vector<8x14xf32>
    %27 = arith.subf %21, %26 : vector<8x14xf32>
    %c0_15 = arith.constant 0 : index
    %c0_16 = arith.constant 0 : index
    %c0_17 = arith.constant 0 : index
    %28 = vector.load %arg6[%c0_15, %c0_16, %c0_17] : memref<1x8x14xf32, #tpu.memory_space<vmem>>, vector<1x8x14xf32>
    %29 = vector.shape_cast %28 : vector<1x8x14xf32> to vector<8x14xf32>
    %30 = vector.shape_cast %27 : vector<8x14xf32> to vector<1x8x14xf32>
    tpu.vector_store %arg6[%c0_15, %c0_16, %c0_17], %30 {strides = array<i32>} : memref<1x8x14xf32, #tpu.memory_space<vmem>>, vector<1x8x14xf32>,
    return
  }
  func.func @transform_0(%arg0: i32, %arg1: i32) -> (i32, i32, i32) {
    %c0_i32 = arith.constant 0 : i32
    %c0_i32_0 = arith.constant 0 : i32
    %c0_i32_1 = arith.constant 0 : i32
    return %arg0, %c0_i32, %c0_i32_0 : i32, i32, i32
  }
  func.func @transform_1(%arg0: i32, %arg1: i32) -> (i32, i32, i32, i32) {
    %c0_i32 = arith.constant 0 : i32
    %c0_i32_0 = arith.constant 0 : i32
    %c0_i32_1 = arith.constant 0 : i32
    return %arg0, %arg1, %c0_i32, %c0_i32_0 : i32, i32, i32, i32
  }
  func.func @transform_2(%arg0: i32, %arg1: i32) -> (i32, i32, i32) {
    %c0_i32 = arith.constant 0 : i32
    %c0_i32_0 = arith.constant 0 : i32
    %c0_i32_1 = arith.constant 0 : i32
    %c0_i32_2 = arith.constant 0 : i32
    return %c0_i32, %c0_i32_0, %c0_i32_1 : i32, i32, i32
  }
  func.func @transform_3(%arg0: i32, %arg1: i32) -> (i32, i32) {
    %c0_i32 = arith.constant 0 : i32
    %c0_i32_0 = arith.constant 0 : i32
    %c0_i32_1 = arith.constant 0 : i32
    return %c0_i32, %c0_i32_0 : i32, i32
  }
  func.func @transform_4(%arg0: i32, %arg1: i32) -> (i32, i32, i32) {
    %c0_i32 = arith.constant 0 : i32
    %c0_i32_0 = arith.constant 0 : i32
    return %arg0, %c0_i32, %arg1 : i32, i32, i32
  }
}

</mosaic_0001>

<llo_original>
// kernel: tpu_custom_call.1
$region0: #{tpu_custom_call.1}
  #allocation0 [shape = 'u32[]', space=smem, size = 0x4, offset = 0x4, fixed_abs, tag = 'smem constant byte address 0x4 - core index']
  #allocation1 [shape = 'u32[72,128]{1,0:T(1,128)}', space=vmem, size = 0x9000, scoped, tag = 'internal scratch']
  %s0 = inlined_call_operand.vmem [shape: f32[2,4,16], index: 0, kind: input, shape index: {}]
  %s1 = inlined_call_operand.vmem [shape: f32[2,1,4,2], index: 1, kind: input, shape index: {}]
  %s2 = inlined_call_operand.vmem [shape: f32[3,8,4], index: 2, kind: input, shape index: {}]
  %s3 = inlined_call_operand.vmem [shape: f32[8,1], index: 3, kind: input, shape index: {}]
  %s4 = inlined_call_operand.hbm [shape: f32[2,8,14], index: 4, kind: output, shape index: {}]
  %s5 = sld [smem:[#allocation0]]
  $region49: #{tpu_custom_call.1} parent=0
    _
  %s7 = ssub.s32 1, %s5
  %s8 = scalar_select 0, %s7, %s5
  $region1: #{tpu_custom_call.1} parent=0
    #allocation2 [shape = 'u8[8192]{0}', space=vmem, size = 0x2000, scoped, tag = 'output window, operand 0']
    #allocation3 [shape = 's32[2]{0}', space=sflag, size = 0x8, scoped, tag = 'scoped memory for tpu_custom_call.1']
    %9 = vsyncpa [#allocation3], 0
    %s10 = scalar_lea.sflag [#allocation3], 1
    %11 = vsyncpa %s10, 0
    loop: start=0, step=1, limit=4
    $region2: #{tpu_custom_call.1} parent=1 // loop_pre_header
      _
    $region3: #{tpu_custom_call.1} parent=1 // loop_header
      %s13 = sphi 0, %s17
      %p14 = scmp.ge.s32.totalorder %s13, 4
      %s20 = sphi 0, %s32
      %s21 = sphi 0, %s28
      %s22 = sphi 0, %s20
      %s23 = sphi 0, %s21
      %s24 = sphi 0, %s22
      %s25 = sphi 0, %s23
      %s35 = sphi 0, %s37
      %s38 = sphi 0, %s35
      %s39 = sphi 0, %s38
      %s55 = sphi 0, %s39
      %s63 = sphi 0, %s65
      %s66 = sphi 0, %s63
      %s67 = sphi 0, %s66
      %s83 = sphi 0, %s67
      %s87 = sphi 0, %s87
      %s89 = sphi 0, %s87
      %s90 = sphi 0, %s89
      %s104 = sphi 0, %s90
      %s108 = sphi 0, %s108
      %s110 = sphi 0, %s108
      %s111 = sphi 0, %s110
      %s125 = sphi 0, %s111
      %s133 = sphi 0, %s135
      %s136 = sphi 0, %s133
      %s137 = sphi 0, %s136
      %s153 = sphi 0, %s137
    $region4: #{tpu_custom_call.1} parent=1 // loop_header_branch
      %16 = sbr.rel (%p14) target = $region8
    $region5: #{tpu_custom_call.1} parent=1 // loop_body
      %s18 = ssub.s32 %s13, 1
      %s19 = ssub.s32 %s13, 2
      %s26 = sadd.s32 1, %s21
      %p27 = scmp.ge.s32.totalorder %s26, 1
      %s28 = scalar_select %p27, 0, %s26
      %s29 = sadd.s32 1, %s20
      %s30 = scalar_select %p27, %s29, %s20
      %p31 = scmp.ge.s32.totalorder %s30, 2
      %s32 = scalar_select %p31, 0, %s30
      %s33 = ssub.s32 %s20, %s32
      %p34 = scmp.eq.s32.totalorder %s33, 0
      %s36 = sadd.s32 %s35, 1
      %s37 = scalar_select %p34, %s35, %s36
      %p40 = pneg %p34
      %p41 = scmp.eq.s32.totalorder %s13, 1
      %p42 = por %p40, %p41
      %p43 = scmp.ne.s32.totalorder %s35, %s38
      %p44 = scmp.eq.s32.totalorder %s13, 0
      %p45 = por %p43, %p44
      %p46 = scmp.ne.s32.totalorder %s35, %s38
      %p47 = scmp.eq.s32.totalorder %s18, 1
      %p48 = por %p46, %p47
      %p49 = scmp.ne.s32.totalorder %s38, %s39
      %p50 = scmp.eq.s32.totalorder %s18, 0
      %p51 = por %p49, %p50
      %p52 = scmp.ne.s32.totalorder %s38, %s39
      %p53 = scmp.eq.s32.totalorder %s19, 1
      %p54 = por %p52, %p53
      %p56 = scmp.ne.s32.totalorder %s39, %s55
      %p57 = scmp.eq.s32.totalorder %s19, 0
      %p58 = por %p56, %p57
      %s59 = ssub.s32 %s20, %s32
      %s60 = ssub.s32 %s21, %s28
      %s61 = sor.u32 %s59, %s60
      %p62 = scmp.eq.s32.totalorder %s61, 0
      %s64 = sadd.s32 %s63, 1
      %s65 = scalar_select %p62, %s63, %s64
      %p68 = pneg %p62
      %p69 = scmp.eq.s32.totalorder %s13, 1
      %p70 = por %p68, %p69
      %p71 = scmp.ne.s32.totalorder %s63, %s66
      %p72 = scmp.eq.s32.totalorder %s13, 0
      %p73 = por %p71, %p72
      %p74 = scmp.ne.s32.totalorder %s63, %s66
      %p75 = scmp.eq.s32.totalorder %s18, 1
      %p76 = por %p74, %p75
      %p77 = scmp.ne.s32.totalorder %s66, %s67
      %p78 = scmp.eq.s32.totalorder %s18, 0
      %p79 = por %p77, %p78
      %p80 = scmp.ne.s32.totalorder %s66, %s67
      %p81 = scmp.eq.s32.totalorder %s19, 1
      %p82 = por %p80, %p81
      %p84 = scmp.ne.s32.totalorder %s67, %s83
      %p85 = scmp.eq.s32.totalorder %s19, 0
      %p86 = por %p84, %p85
      %s88 = sadd.s32 %s87, 1
      %p91 = scmp.eq.s32.totalorder %s13, 1
      %p92 = scmp.ne.s32.totalorder %s87, %s89
      %p93 = scmp.eq.s32.totalorder %s13, 0
      %p94 = por %p92, %p93
      %p95 = scmp.ne.s32.totalorder %s87, %s89
      %p96 = scmp.eq.s32.totalorder %s18, 1
      %p97 = por %p95, %p96
      %p98 = scmp.ne.s32.totalorder %s89, %s90
      %p99 = scmp.eq.s32.totalorder %s18, 0
      %p100 = por %p98, %p99
      %p101 = scmp.ne.s32.totalorder %s89, %s90
      %p102 = scmp.eq.s32.totalorder %s19, 1
      %p103 = por %p101, %p102
      %p105 = scmp.ne.s32.totalorder %s90, %s104
      %p106 = scmp.eq.s32.totalorder %s19, 0
      %p107 = por %p105, %p106
      %s109 = sadd.s32 %s108, 1
      %p112 = scmp.eq.s32.totalorder %s13, 1
      %p113 = scmp.ne.s32.totalorder %s108, %s110
      %p114 = scmp.eq.s32.totalorder %s13, 0
      %p115 = por %p113, %p114
      %p116 = scmp.ne.s32.totalorder %s108, %s110
      %p117 = scmp.eq.s32.totalorder %s18, 1
      %p118 = por %p116, %p117
      %p119 = scmp.ne.s32.totalorder %s110, %s111
      %p120 = scmp.eq.s32.totalorder %s18, 0
      %p121 = por %p119, %p120
      %p122 = scmp.ne.s32.totalorder %s110, %s111
      %p123 = scmp.eq.s32.totalorder %s19, 1
      %p124 = por %p122, %p123
      %p126 = scmp.ne.s32.totalorder %s111, %s125
      %p127 = scmp.eq.s32.totalorder %s19, 0
      %p128 = por %p126, %p127
      %s129 = ssub.s32 %s20, %s32
      %s130 = ssub.s32 %s21, %s28
      %s131 = sor.u32 %s129, %s130
      %p132 = scmp.eq.s32.totalorder %s131, 0
      %s134 = sadd.s32 %s133, 1
      %s135 = scalar_select %p132, %s133, %s134
      %p138 = pneg %p132
      %p139 = scmp.eq.s32.totalorder %s13, 1
      %p140 = por %p138, %p139
      %p141 = scmp.ne.s32.totalorder %s133, %s136
      %p142 = scmp.eq.s32.totalorder %s13, 0
      %p143 = por %p141, %p142
      %p144 = scmp.ne.s32.totalorder %s133, %s136
      %p145 = scmp.eq.s32.totalorder %s18, 1
      %p146 = por %p144, %p145
      %p147 = scmp.ne.s32.totalorder %s136, %s137
      %p148 = scmp.eq.s32.totalorder %s18, 0
      %p149 = por %p147, %p148
      %p150 = scmp.ne.s32.totalorder %s136, %s137
      %p151 = scmp.eq.s32.totalorder %s19, 1
      %p152 = por %p150, %p151
      %p154 = scmp.ne.s32.totalorder %s137, %s153
      %p155 = scmp.eq.s32.totalorder %s19, 0
      %p156 = por %p154, %p155
      %p157 = scmp.le.s32.totalorder 1, %s13
      %p158 = scmp.lt.s32.totalorder %s13, 3
      %p159 = pnand %p157, %p158
      %p160 = pneg %p159
      // Predicated region
      $region9: #{tpu_custom_call.1} parent=5 // pred_check
        _
      $region10: #{tpu_custom_call.1} parent=5 // pred_check_branch
        %162 = sbr.rel (%p159) target = $region12
      $region11: #{tpu_custom_call.1} parent=5 // pred_region
        %s163 = ssub.s32 %s13, 1
        // Predicated region
        $region13: #{tpu_custom_call.1} parent=11 // pred_check
          %p164 = pneg %p100
        $region14: #{tpu_custom_call.1} parent=11 // pred_check_branch
          %166 = sbr.rel (%p164) target = $region16
        $region15: #{tpu_custom_call.1} parent=11 // pred_region
          _
        $region16: #{tpu_custom_call.1} parent=11 // pred_fallthru
          _
        // Predicated region
        $region17: #{tpu_custom_call.1} parent=11 // pred_check
          %p167 = pneg %p121
        $region18: #{tpu_custom_call.1} parent=11 // pred_check_branch
          %169 = sbr.rel (%p167) target = $region20
        $region19: #{tpu_custom_call.1} parent=11 // pred_region
          _
        $region20: #{tpu_custom_call.1} parent=11 // pred_fallthru
          _
      $region12: #{tpu_custom_call.1} parent=5 // pred_fallthru
        _
      %p170 = scmp.lt.s32.totalorder %s13, 2
      // Predicated region
      $region21: #{tpu_custom_call.1} parent=5 // pred_check
        %p171 = pneg %p170
      $region22: #{tpu_custom_call.1} parent=5 // pred_check_branch
        %173 = sbr.rel (%p171) target = $region24
      $region23: #{tpu_custom_call.1} parent=5 // pred_region
        // Predicated region
        $region25: #{tpu_custom_call.1} parent=23 // pred_check
          %p174 = pneg %p45
        $region26: #{tpu_custom_call.1} parent=23 // pred_check_branch
          %176 = sbr.rel (%p174) target = $region28
        $region27: #{tpu_custom_call.1} parent=23 // pred_region
          %p177 = scmp.lt.s32.totalorder %s20, 1
          %s178 = scalar_select %p177, %s20, 1
          %s179 = smul.addr %s178, 4
          %s180 = scalar_lea.vmem %s0, %s179
        $region28: #{tpu_custom_call.1} parent=23 // pred_fallthru
          _
        // Predicated region
        $region29: #{tpu_custom_call.1} parent=23 // pred_check
          %p181 = pneg %p73
        $region30: #{tpu_custom_call.1} parent=23 // pred_check_branch
          %183 = sbr.rel (%p181) target = $region32
        $region31: #{tpu_custom_call.1} parent=23 // pred_region
          %p184 = scmp.lt.s32.totalorder %s20, 1
          %s185 = scalar_select %p184, %s20, 1
          %p186 = scmp.lt.s32.totalorder %s21, 0
          %s187 = scalar_select %p186, %s21, 0
          %s188 = sadd.s32 %s187, %s185
          %s189 = smul.addr %s188, 4
          %s190 = scalar_lea.vmem %s1, %s189
        $region32: #{tpu_custom_call.1} parent=23 // pred_fallthru
          _
      $region24: #{tpu_custom_call.1} parent=5 // pred_fallthru
        _
      %p191 = scmp.le.s32.totalorder 1, %s13
      %p192 = scmp.lt.s32.totalorder %s13, 3
      %p193 = pnand %p191, %p192
      %p194 = pneg %p193
      // Predicated region
      $region33: #{tpu_custom_call.1} parent=5 // pred_check
        _
      $region34: #{tpu_custom_call.1} parent=5 // pred_check_branch
        %196 = sbr.rel (%p193) target = $region36
      $region35: #{tpu_custom_call.1} parent=5 // pred_region
        %s197 = ssub.s32 %s13, 1
        %p198 = scmp.lt.s32.totalorder %s22, 1
        %s199 = scalar_select %p198, %s22, 1
        %s200 = smul.addr %s199, 4
        %s201 = scalar_lea.vmem %s0, %s200
        %p202 = pneg %p51
        %p203 = pneg %p48
        %p204 = scmp.lt.s32.totalorder %s22, 1
        %s205 = scalar_select %p204, %s22, 1
        %p206 = scmp.lt.s32.totalorder %s23, 0
        %s207 = scalar_select %p206, %s23, 0
        %s208 = sadd.s32 %s207, %s205
        %s209 = smul.addr %s208, 4
        %s210 = scalar_lea.vmem %s1, %s209
        %p211 = pneg %p79
        %p212 = pneg %p76
        %p213 = pneg %p100
        %p214 = pneg %p97
        %p215 = pneg %p121
        %p216 = pneg %p118
        %p217 = pneg %p149
        %p218 = pneg %p146
        %s219 = sand.u32 %s136, 1
        %s220 = scalar_lea.sflag [#allocation3], %s219
        %s221 = sand.u32 %s136, 1
        %s222 = smul.addr %s221, 8
        %s223 = scalar_lea.vmem [#allocation2], %s222
        %p224 = scmp.lt.s32.totalorder %s22, 1
        %s225 = scalar_select %p224, %s22, 1
        %s226 = smul.addr %s225, 4
        %s227 = scalar_lea.vmem %s0, %s226
        %p228 = scmp.lt.s32.totalorder %s22, 1
        %s229 = scalar_select %p228, %s22, 1
        %p230 = scmp.lt.s32.totalorder %s23, 0
        %s231 = scalar_select %p230, %s23, 0
        %s232 = sadd.s32 %s231, %s229
        %s233 = smul.addr %s232, 4
        %s234 = scalar_lea.vmem %s1, %s233
        %v235 = vld [vmem:[%s227] sm:$0xf]
        %v236 = vld [vmem:[%s3] sm:$0xff]
        %238 = vset.pattern.permute.xlu0 0
        %239 = vperm.xlu0 %238, %v236
        %v240 = vpop.permute.xlu0 %239
        %v242 = vld [vmem:[%s2] sm:$0xff]
        %vm243 = vcmask 31744
        %v245 = vsel %vm243, %v242, 0
        %vm247 = vcmask 1043456
        %v249 = vsel %vm247, %v235, 0
        %251 = vmatpush.msra.mxu0 0.0
        %252 = vmatpush.msra.mxu0 0.0
        %253 = vmatpush.msra.mxu0 0.0
        %254 = vmatpush.msra.mxu0 0.0
        %255 = vmatpush.msra.mxu0 0.0
        %256 = vmatpush.msra.mxu0 0.0
        %257 = vmatpush.msra.mxu0 0.0
        %258 = vmatpush.msra.mxu0 0.0
        %259 = vmatpush.msra.mxu0 0.0
        %260 = vmatpush.msra.mxu0 0.0
        %261 = vmatpush.msra.mxu0 0.0
        %262 = vmatpush.msra.mxu0 0.0
        %263 = vmatpush.msra.mxu0 0.0
        %264 = vmatpush.msra.mxu0 0.0
        %265 = vmatpush.msra.mxu0 0.0
        %266 = vmatpush.msra.mxu0 %v249
        %267 = vmatmul.f32.gmra.mxu0 %v245
        %v268 = vpop.f32.mrf.mxu0
        %v269 = vadd.f32 0.0, %v268
        %270 = vdwg.mxu0
        %v271 = vadd.f32 %v240, %v269
        %s272 = scalar_lea.vmem %s2, 8
        %v273 = vld [vmem:[%s272] sm:$0xff]
        %274 = vrot.lane.b32.xlu0 %v235, 127
        %v275 = vpop.permute.xlu0 %274
        %v277 = vsel %vm243, %v273, 0
        %v279 = vsel %vm247, %v275, 0
        %281 = vmatpush.msra.mxu0 0.0
        %282 = vmatpush.msra.mxu0 0.0
        %283 = vmatpush.msra.mxu0 0.0
        %284 = vmatpush.msra.mxu0 0.0
        %285 = vmatpush.msra.mxu0 0.0
        %286 = vmatpush.msra.mxu0 0.0
        %287 = vmatpush.msra.mxu0 0.0
        %288 = vmatpush.msra.mxu0 0.0
        %289 = vmatpush.msra.mxu0 0.0
        %290 = vmatpush.msra.mxu0 0.0
        %291 = vmatpush.msra.mxu0 0.0
        %292 = vmatpush.msra.mxu0 0.0
        %293 = vmatpush.msra.mxu0 0.0
        %294 = vmatpush.msra.mxu0 0.0
        %295 = vmatpush.msra.mxu0 0.0
        %296 = vmatpush.msra.mxu0 %v279
        %297 = vmatmul.f32.gmra.mxu0 %v277
        %v298 = vpop.f32.mrf.mxu0
        %v299 = vadd.f32 0.0, %v298
        %300 = vdwg.mxu0
        %v301 = vadd.f32 %v271, %v299
        %s302 = scalar_lea.vmem %s2, 16
        %v303 = vld [vmem:[%s302] sm:$0xff]
        %304 = vrot.lane.b32.xlu0 %v235, 126
        %v305 = vpop.permute.xlu0 %304
        %v307 = vsel %vm243, %v303, 0
        %v309 = vsel %vm247, %v305, 0
        %311 = vmatpush.msra.mxu0 0.0
        %312 = vmatpush.msra.mxu0 0.0
        %313 = vmatpush.msra.mxu0 0.0
        %314 = vmatpush.msra.mxu0 0.0
        %315 = vmatpush.msra.mxu0 0.0
        %316 = vmatpush.msra.mxu0 0.0
        %317 = vmatpush.msra.mxu0 0.0
        %318 = vmatpush.msra.mxu0 0.0
        %319 = vmatpush.msra.mxu0 0.0
        %320 = vmatpush.msra.mxu0 0.0
        %321 = vmatpush.msra.mxu0 0.0
        %322 = vmatpush.msra.mxu0 0.0
        %323 = vmatpush.msra.mxu0 0.0
        %324 = vmatpush.msra.mxu0 0.0
        %325 = vmatpush.msra.mxu0 0.0
        %326 = vmatpush.msra.mxu0 %v309
        %327 = vmatmul.f32.gmra.mxu0 %v307
        %v328 = vpop.f32.mrf.mxu0
        %v329 = vadd.f32 0.0, %v328
        %330 = vdwg.mxu0
        %v331 = vadd.f32 %v301, %v329
        %v332 = vmin.f32 %v331, 0.0
        %v333 = vand.u32 2147483647, %v331
        %v334 = vsub.f32 0.0, %v333
        %v335 = vmul.f32 %v334, 1.442695
        %v336 = vpow.pop %v335
        %v337 = vadd.f32 %v336, 1.0
        %v338 = vlog2.pop %v337
        %v339 = vmul.f32 %v338, 0.6931472
        %v340 = vmul.f32 -0.5, %v336
        %v341 = vadd.f32 %v340, 1.0
        %v342 = vmul.f32 %v341, %v336
        %v343 = vand.u32 2147483647, %v336
        %vm344 = vcmp.lt.f32.partialorder %v343, 0.0004427343
        %v345 = vsel %vm344, %v342, %v339
        %v346 = vsub.f32 %v332, %v345
        %vm347 = vcmask 113664
        %348 = vst.msk [vmem:[%s223] sm:$0xff] %vm347, %v346
        %s349 = sand.u32 %s136, 1
        %s350 = scalar_lea.sflag [#allocation3], %s349
        %s351 = sand.u32 %s136, 1
        %s352 = smul.addr %s351, 8
        %s353 = scalar_lea.vmem [#allocation2], %s352
        // Predicated region
        $region37: #{tpu_custom_call.1} parent=35 // pred_check
          %p354 = pneg %p146
        $region38: #{tpu_custom_call.1} parent=35 // pred_check_branch
          %356 = sbr.rel (%p354) target = $region40
        $region39: #{tpu_custom_call.1} parent=35 // pred_region
          %358 = vsyncadd %s350, 0
          %s359 = sadd.s32 %s23, %s22
          %s360 = smul.addr %s359, 8
          %s361 = scalar_lea.hbm %s4, %s360
          %s363 = sshll.u32 %s353, 4
          %s364 = int_to_ptr.vmem [resolvable:$true] %s363
          %s365 = sshll.u32 %s361, 4
          %s366 = int_to_ptr.hbm [resolvable:$true] %s365
          %368 = dma.vmem_to_hbm [thread:$0]  %s364, 128, %s366, %s350
        $region40: #{tpu_custom_call.1} parent=35 // pred_fallthru
          _
      $region36: #{tpu_custom_call.1} parent=5 // pred_fallthru
        _
      %p369 = scmp.le.s32.totalorder 2, %s13
      // Predicated region
      $region41: #{tpu_custom_call.1} parent=5 // pred_check
        %p370 = pneg %p369
      $region42: #{tpu_custom_call.1} parent=5 // pred_check_branch
        %372 = sbr.rel (%p370) target = $region44
      $region43: #{tpu_custom_call.1} parent=5 // pred_region
        %s373 = ssub.s32 %s13, 2
        // Predicated region
        $region45: #{tpu_custom_call.1} parent=43 // pred_check
          %p374 = pneg %p152
        $region46: #{tpu_custom_call.1} parent=43 // pred_check_branch
          %376 = sbr.rel (%p374) target = $region48
        $region47: #{tpu_custom_call.1} parent=43 // pred_region
          %s377 = sand.u32 %s137, 1
          %s378 = scalar_lea.sflag [#allocation3], %s377
          %s379 = sand.u32 %s137, 1
          %s380 = smul.addr %s379, 8
          %s381 = scalar_lea.vmem [#allocation2], %s380
          %383 = dma.done %s378, 128
        $region48: #{tpu_custom_call.1} parent=43 // pred_fallthru
          _
      $region44: #{tpu_custom_call.1} parent=5 // pred_fallthru
        _
    $region6: #{tpu_custom_call.1} parent=1 // loop_footer
      %s17 = sadd.s32 1, %s13
    $region7: #{tpu_custom_call.1} parent=1 // loop_footer_branch
      %12 = sbr.rel target = $region3
    $region8: #{tpu_custom_call.1} parent=1 // loop_exit
      _
    %384 = vsyncpa [#allocation3], 1
    %s385 = scalar_lea.sflag [#allocation3], 1
    %386 = vsyncpa %s385, 1

</llo_original>
